<compile_context>
chip_gen: v5e
topology: v5e:2x2
jax: 0.10.0
libtpu: 0.0.40
codegen_flags: <defaults>
</compile_context>

<pallas_src>
import functools

import jax
import jax.numpy as jnp
from jax import lax
from jax.experimental import pallas as pl
from jax.experimental.pallas import tpu as pltpu


# ----------------------------------------------------------------------------------
# Kernel
# ----------------------------------------------------------------------------------
def _focal_tile(x, oh, col_start, *, alpha, gamma, spatial, masked, approx_rcp):
    """Exact per-class focal loss on one chunk.

    x, oh: (bn, C, ch) float32 logits / dense labels.  Returns (bn, 1, ch) float32.
    """
    m = jnp.max(x, axis=1, keepdims=True)                  # (bn, 1, ch)  sublane reduce
    e = jnp.exp(x - m)                                     # (bn, C, ch)
    s = jnp.sum(e, axis=1, keepdims=True)                  # (bn, 1, ch)
    if approx_rcp:
        # v7x knob: EUP vrcp instead of precise divide (~1e-3 relative).
        inv_s = pl.reciprocal(s, approx=True)
    else:
        inv_s = 1.0 / s                                    # one divide per pixel (not per class)
    p = e * inv_s + 1e-9                                   # softmax + eps, as the reference
    neg_logp = -jnp.log(p)                                 # (bn, C, ch)
    base = 1.0 - p
    if float(gamma) == int(gamma):                         # static (trace-time) branch
        g = int(gamma)
        if g == 0:
            w = jnp.ones_like(base)
        else:
            w = base
            for _ in range(g - 1):
                w = w * base                               # integer power via multiplies
    else:
        # TODO(synk): fractional gamma can NaN when p saturates (1 - p - eps < 0); the
        # PyTorch reference has the same hazard, so we match it rather than clamp.
        w = jnp.power(base, gamma)
    loss = alpha * jnp.sum(oh * neg_logp * w, axis=1, keepdims=True)   # (bn, 1, ch)
    if masked:
        # Ragged spatial tail: boundary blocks contain unspecified data; zero them out.
        # Keep this select as the LAST op on the lane vector (NaN containment).
        ch = x.shape[-1]
        col = lax.broadcasted_iota(jnp.int32, (1, 1, ch), 2) + col_start
        loss = jnp.where(col < spatial, loss, 0.0)
    return loss


def _focal_loss_kernel(logits_ref, labels_ref, out_ref, *,
                       alpha, gamma, spatial, chunk, approx_rcp):
    """One (bn, C, TILE_S) logits + dense-label block -> resident (bn, 1, TILE_S) accumulator."""
    j = pl.program_id(2)                                   # "arbitrary" spatial-tile axis

    @pl.when(j == 0)
    def _init():
        out_ref[...] = jnp.zeros_like(out_ref)

    bn, c, tile_s = logits_ref.shape
    masked = (spatial % tile_s) != 0
    # Global column offset of this block: (spatial-parallel split, arbitrary axis).
    col_base = (pl.program_id(1) * pl.num_programs(2) + j) * tile_s

    tile_kw = dict(alpha=alpha, gamma=gamma, spatial=spatial,
                   masked=masked, approx_rcp=approx_rcp)

    if tile_s <= chunk:
        # Small block: single shot, no inner loop.
        x = logits_ref[...].astype(jnp.float32)
        oh = labels_ref[...].astype(jnp.float32)
        out_ref[...] += _focal_tile(x, oh, col_base, **tile_kw)
    else:
        # Large resident block: chunk over lanes to bound the live vreg set while the
        # per-grid-step DMA block stays large (HBM-roofline friendly).
        n_chunks = tile_s // chunk                         # tile_s % chunk == 0 by construction

        def body(k, carry):
            start = pl.multiple_of(k * chunk, 128)
            x = logits_ref[:, :, pl.ds(start, chunk)].astype(jnp.float32)
            oh = labels_ref[:, :, pl.ds(start, chunk)].astype(jnp.float32)
            out_ref[:, :, pl.ds(start, chunk)] += _focal_tile(
                x, oh, col_base + start, **tile_kw)
            return carry

        lax.fori_loop(0, n_chunks, body, 0)


# ----------------------------------------------------------------------------------
# Blocking / tiling policy
# ----------------------------------------------------------------------------------
def _largest_divisor_leq(n, cap):
    cap = max(1, min(int(n), int(cap)))
    for d in range(cap, 0, -1):
        if n % d == 0:
            return d
    return 1


def _choose_blocking(n, c, spatial, logits_bytes, labels_bytes):
    """Returns (bn, tile_s, chunk)."""
    bytes_per_lane = c * (logits_bytes + labels_bytes)     # fresh HBM bytes / pixel / batch row
    target = 2 << 20                                       # >= ~2 MiB of input per grid step
    vmem_budget = 16 << 20                                 # double-buffered footprint cap (v5e/v7x safe)
    per_lane_vmem = 2 * bytes_per_lane + 2 * 4             # 2x-buffered inputs + f32 accumulator
    max_lanes = max(128, vmem_budget // per_lane_vmem)
    want_lanes = min(max(128, -(-target // bytes_per_lane)), max_lanes)

    # Small feature maps: fold several batch rows into one grid step.
    if spatial < want_lanes:
        bn = _largest_divisor_leq(n, max(1, want_lanes // spatial))
    else:
        bn = 1

    # Inner lane-chunk width: classes pad to 8 sublanes, keep ~a few KiB live per array.
    c_pad = ((c + 7) // 8) * 8
    chunk = (4096 // (bn * c_pad)) // 128 * 128
    chunk = max(128, min(1024, chunk))

    if spatial <= chunk:
        tile_s = spatial                                   # full-dim block, single chunk
    else:
        lane_goal = max(chunk, min(want_lanes // bn, max_lanes // bn))
        tile_s = max(chunk, lane_goal // chunk * chunk)
        tile_s = min(tile_s, max(chunk, spatial // chunk * chunk))
    return bn, tile_s, chunk


# ----------------------------------------------------------------------------------
# pallas_call wrapper
# ----------------------------------------------------------------------------------
def _focal_loss_sum(logits, labels, *, alpha, gamma, approx_reciprocal=False):
    """Returns (sum over all pixels of the per-pixel focal loss, N * spatial)."""
    if labels.shape != logits.shape:
        raise ValueError(
            "SoftmaxFocalLoss expects dense (one-hot / soft) labels with the same shape "
            f"as logits, got {labels.shape} vs {logits.shape}")

    n, c = int(logits.shape[0]), int(logits.shape[1])
    spatial = 1
    for d in logits.shape[2:]:
        spatial *= int(d)

    # Free contiguous reshapes: native NCHW layout, native dtypes (cast in-kernel).
    x = logits.reshape(n, c, spatial)
    oh = labels.reshape(n, c, spatial)

    bn, tile_s, chunk = _choose_blocking(
        n, c, spatial, x.dtype.itemsize, oh.dtype.itemsize)

    num_i = n // bn
    num_j_total = pl.cdiv(spatial, tile_s)
    # v7x: if there is only a single batch group, split the spatial tiles over a second
    # "parallel" axis so both TensorCores work; harmless no-op on single-TC v5e/v6e.
    split = 2 if (num_i == 1 and num_j_total >= 2 and num_j_total % 2 == 0) else 1
    num_jp = num_j_total // split

    partial = pl.pallas_call(
        functools.partial(
            _focal_loss_kernel, alpha=float(alpha), gamma=float(gamma),
            spatial=spatial, chunk=chunk, approx_rcp=bool(approx_reciprocal)),
        out_shape=jax.ShapeDtypeStruct((split * n, 1, tile_s), jnp.float32),
        grid=(num_i, split, num_jp),
        in_specs=[
            pl.BlockSpec((bn, c, tile_s), lambda i, p, j: (i, 0, p * num_jp + j)),
            pl.BlockSpec((bn, c, tile_s), lambda i, p, j: (i, 0, p * num_jp + j)),
        ],
        out_specs=pl.BlockSpec((bn, 1, tile_s), lambda i, p, j: (p * num_i + i, 0, 0)),
        compiler_params=pltpu.CompilerParams(
            dimension_semantics=("parallel", "parallel", "arbitrary"),
            vmem_limit_bytes=32 * 1024 * 1024,
        ),
    )(x, oh)

    # Tiny final reduction of the per-lane / per-block partial sums in plain JAX.
    return jnp.sum(partial), n * spatial


class SoftmaxFocalLossPallas:
    """Mirror of hat SoftmaxFocalLoss forward, Pallas TPU backend."""

    def __init__(self, loss_name, num_classes, alpha=0.25, gamma=2.0,
                 reduction="mean", weight=1.0, approx_reciprocal=False):
        self.loss_name = loss_name
        self.num_classes = num_classes
        self.alpha = alpha
        self.gamma = gamma
        self.reduction = reduction
        self.weight = weight
        self.approx_reciprocal = approx_reciprocal

    def _focal_loss(self, logits, label):
        total, n_elems = _focal_loss_sum(
            logits, label, alpha=self.alpha, gamma=self.gamma,
            approx_reciprocal=self.approx_reciprocal)
        if self.reduction == "mean":
            return total / n_elems
        elif self.reduction == "sum":
            return total
        # TODO(synk): reduction='none' (per-pixel map) not implemented; module docstring
        # only specifies 'mean' | 'sum'.
        raise ValueError(f"unsupported reduction: {self.reduction}")

    def __call__(self, logits, labels):
        if isinstance(logits, (list, tuple)):
            if not isinstance(self.weight, (list, tuple)):
                weights = [self.weight] * len(logits)
            else:
                weights = self.weight
            val = sum(self._focal_loss(lg, lb) * w
                      for lg, lb, w in zip(logits, labels, weights))
            return {self.loss_name: val}
        return {self.loss_name: self._focal_loss(logits, labels) * self.weight}


# ----------------------------------------------------------------------------------
# Pure-JAX reference (replica of the PyTorch module) and self-test
# ----------------------------------------------------------------------------------
def _focal_loss_reference(logits, label, alpha, gamma, reduction, weight):
    probs = jax.nn.softmax(logits.astype(jnp.float32), axis=1) + 1e-9
    ce = -jnp.log(probs) * label.astype(jnp.float32)
    w = jnp.power(1.0 - probs, gamma)
    loss = (ce * w * alpha).sum(axis=1)
    loss = loss.mean() if reduction == "mean" else loss.sum()
    return loss * weight


def _check(logits, label, alpha, gamma, reduction, weight):
    loss_fn = SoftmaxFocalLossPallas(
        loss_name="loss", num_classes=logits.shape[1],
        alpha=alpha, gamma=gamma, reduction=reduction, weight=weight)
    out = jax.block_until_ready(loss_fn(logits, label)["loss"])
    ref = jax.block_until_ready(
        _focal_loss_reference(logits, label, alpha, gamma, reduction, weight))
    assert jnp.allclose(out, ref, rtol=1e-5, atol=1e-6), (out, ref)


if __name__ == "__main__":
    key = jax.random.PRNGKey(0)
    k1, k2, k3, k4, k5, k6 = jax.random.split(key, 6)

    # 1) Main case: NCHW logits + hard one-hot labels (batch=2, channels=4, 16x16).
    N, C, H, W = 2, 4, 16, 16
    logits = jax.random.normal(k1, (N, C, H, W), dtype=jnp.float32)
    label_idx = jax.random.randint(k2, (N, H, W), 0, C)
    one_hot = jax.nn.one_hot(label_idx, C, axis=1, dtype=jnp.float32)
    _check(logits, one_hot, alpha=0.25, gamma=2.0, reduction="mean", weight=1.0)

    # 2) Ragged spatial tail + v7x spatial split path (N=1, 24x24), fractional gamma, sum.
    logits2 = jax.random.normal(k3, (1, 4, 24, 24), dtype=jnp.float32)
    idx2 = jax.random.randint(k4, (1, 24, 24), 0, 4)
    oh2 = jax.nn.one_hot(idx2, 4, axis=1, dtype=jnp.float32)
    _check(logits2, oh2, alpha=0.25, gamma=1.5, reduction="sum", weight=2.0)

    # 3) Inner-chunked path (N=1, 32x32) with SOFT labels (exact per-class semantics).
    logits3 = jax.random.normal(k5, (1, 4, 32, 32), dtype=jnp.float32)
    soft3 = jax.random.uniform(k6, (1, 4, 32, 32), dtype=jnp.float32)
    _check(logits3, soft3, alpha=0.25, gamma=2.0, reduction="mean", weight=1.0)

    print("KERNEL_OK")
</pallas_src>

<mosaic_0001>
module attributes {stable_mosaic.version = 11 : i64} {
  func.func @_focal_loss_kernel(%arg0: i32, %arg1: i32, %arg2: i32, %arg3: memref<2x4x256xf32, #tpu.memory_space<vmem>>, %arg4: memref<2x4x256xf32, #tpu.memory_space<vmem>>, %arg5: memref<2x1x256xf32, #tpu.memory_space<vmem>>) attributes {dimension_semantics = [#tpu.dimension_semantics<parallel>, #tpu.dimension_semantics<parallel>, #tpu.dimension_semantics<arbitrary>], iteration_bounds = array<i64: 1, 1, 1>, scalar_prefetch = 0 : i64, scratch_operands = 0 : i64, tpu.core_type = #tpu.core_type<tc>, window_params = [{transform_indices = @transform_0, window_bounds = array<i64: 2, 4, 256>}, {transform_indices = @transform_1, window_bounds = array<i64: 2, 4, 256>}, {transform_indices = @transform_2, window_bounds = array<i64: 2, 1, 256>}]} {
    %c0_i32 = arith.constant 0 : i32
    %0 = arith.cmpi eq, %arg2, %c0_i32 : i32
    %1 = arith.extui %0 : i1 to i32
    %c0_i32_0 = arith.constant 0 : i32
    %2 = arith.cmpi ne, %1, %c0_i32_0 : i32
    scf.if %2 {
      %cst_19 = arith.constant 0.000000e+00 : f32
      %33 = vector.broadcast %cst_19 : f32 to vector<2x1x256xf32>
      %c0_20 = arith.constant 0 : index
      %c0_21 = arith.constant 0 : index
      %c0_22 = arith.constant 0 : index
      %34 = vector.load %arg5[%c0_20, %c0_21, %c0_22] : memref<2x1x256xf32, #tpu.memory_space<vmem>>, vector<2x1x256xf32>
      tpu.vector_store %arg5[%c0_20, %c0_21, %c0_22], %33 {strides = array<i32>} : memref<2x1x256xf32, #tpu.memory_space<vmem>>, vector<2x1x256xf32>,
    } else {
    }
    %c0 = arith.constant 0 : index
    %c0_1 = arith.constant 0 : index
    %c0_2 = arith.constant 0 : index
    %3 = vector.load %arg3[%c0, %c0_1, %c0_2] : memref<2x4x256xf32, #tpu.memory_space<vmem>>, vector<2x4x256xf32>
    %c0_3 = arith.constant 0 : index
    %c0_4 = arith.constant 0 : index
    %c0_5 = arith.constant 0 : index
    %4 = vector.load %arg4[%c0_3, %c0_4, %c0_5] : memref<2x4x256xf32, #tpu.memory_space<vmem>>, vector<2x4x256xf32>
    %c0_6 = arith.constant 0 : index
    %c0_7 = arith.constant 0 : index
    %c0_8 = arith.constant 0 : index
    %5 = vector.load %arg5[%c0_6, %c0_7, %c0_8] : memref<2x1x256xf32, #tpu.memory_space<vmem>>, vector<2x1x256xf32>
    %cst = arith.constant dense<0xFF800000> : vector<2x256xf32>
    %6 = vector.multi_reduction <maximumf>, %3, %cst [1] : vector<2x4x256xf32> to vector<2x256xf32>
    %7 = vector.shape_cast %6 : vector<2x256xf32> to vector<2x1x256xf32>
    %8 = vector.broadcast %7 : vector<2x1x256xf32> to vector<2x4x256xf32>
    %9 = arith.subf %3, %8 : vector<2x4x256xf32>
    %10 = math.exp %9 : vector<2x4x256xf32>
    %cst_9 = arith.constant dense<0.000000e+00> : vector<2x256xf32>
    %11 = vector.multi_reduction <add>, %10, %cst_9 [1] : vector<2x4x256xf32> to vector<2x256xf32>
    %12 = vector.shape_cast %11 : vector<2x256xf32> to vector<2x1x256xf32>
    %cst_10 = arith.constant 1.000000e+00 : f32
    %13 = vector.broadcast %cst_10 : f32 to vector<2x1x256xf32>
    %14 = arith.divf %13, %12 : vector<2x1x256xf32>
    %15 = vector.broadcast %14 : vector<2x1x256xf32> to vector<2x4x256xf32>
    %16 = arith.mulf %10, %15 : vector<2x4x256xf32>
    %cst_11 = arith.constant 9.99999971E-10 : f32
    %17 = vector.broadcast %cst_11 : f32 to vector<2x4x256xf32>
    %18 = arith.addf %16, %17 : vector<2x4x256xf32>
    %19 = math.log %18 : vector<2x4x256xf32>
    %cst_12 = arith.constant 0.000000e+00 : f32
    %20 = vector.broadcast %cst_12 : f32 to vector<2x4x256xf32>
    %21 = arith.subf %20, %19 : vector<2x4x256xf32>
    %cst_13 = arith.constant 1.000000e+00 : f32
    %22 = vector.broadcast %cst_13 : f32 to vector<2x4x256xf32>
    %23 = arith.subf %22, %18 : vector<2x4x256xf32>
    %24 = arith.mulf %23, %23 : vector<2x4x256xf32>
    %25 = arith.mulf %4, %21 : vector<2x4x256xf32>
    %26 = arith.mulf %25, %24 : vector<2x4x256xf32>
    %cst_14 = arith.constant dense<0.000000e+00> : vector<2x256xf32>
    %27 = vector.multi_reduction <add>, %26, %cst_14 [1] : vector<2x4x256xf32> to vector<2x256xf32>
    %28 = vector.shape_cast %27 : vector<2x256xf32> to vector<2x1x256xf32>
    %cst_15 = arith.constant 2.500000e-01 : f32
    %29 = vector.broadcast %cst_15 : f32 to vector<2x1x256xf32>
    %30 = arith.mulf %29, %28 : vector<2x1x256xf32>
    %31 = arith.addf %5, %30 : vector<2x1x256xf32>
    %c0_16 = arith.constant 0 : index
    %c0_17 = arith.constant 0 : index
    %c0_18 = arith.constant 0 : index
    %32 = vector.load %arg5[%c0_16, %c0_17, %c0_18] : memref<2x1x256xf32, #tpu.memory_space<vmem>>, vector<2x1x256xf32>
    tpu.vector_store %arg5[%c0_16, %c0_17, %c0_18], %31 {strides = array<i32>} : memref<2x1x256xf32, #tpu.memory_space<vmem>>, vector<2x1x256xf32>,
    return
  }
  func.func @transform_0(%arg0: i32, %arg1: i32, %arg2: i32) -> (i32, i32, i32) {
    %c1_i32 = arith.constant 1 : i32
    %0 = arith.muli %arg1, %c1_i32 : i32
    %1 = arith.addi %0, %arg2 : i32
    %c0_i32 = arith.constant 0 : i32
    %c0_i32_0 = arith.constant 0 : i32
    return %arg0, %c0_i32, %1 : i32, i32, i32
  }
  func.func @transform_1(%arg0: i32, %arg1: i32, %arg2: i32) -> (i32, i32, i32) {
    %c1_i32 = arith.constant 1 : i32
    %0 = arith.muli %arg1, %c1_i32 : i32
    %1 = arith.addi %0, %arg2 : i32
    %c0_i32 = arith.constant 0 : i32
    %c0_i32_0 = arith.constant 0 : i32
    return %arg0, %c0_i32, %1 : i32, i32, i32
  }
  func.func @transform_2(%arg0: i32, %arg1: i32, %arg2: i32) -> (i32, i32, i32) {
    %c1_i32 = arith.constant 1 : i32
    %0 = arith.muli %arg1, %c1_i32 : i32
    %1 = arith.addi %0, %arg0 : i32
    %c0_i32 = arith.constant 0 : i32
    %c0_i32_0 = arith.constant 0 : i32
    %c0_i32_1 = arith.constant 0 : i32
    return %1, %c0_i32, %c0_i32_0 : i32, i32, i32
  }
}

</mosaic_0001>

<llo_original>
// kernel: tpu_custom_call.1
$region0: #{tpu_custom_call.1}
  #allocation0 [shape = 'u32[]', space=smem, size = 0x4, offset = 0x4, fixed_abs, tag = 'smem constant byte address 0x4 - core index']
  #allocation1 [shape = 'u32[72,128]{1,0:T(1,128)}', space=vmem, size = 0x9000, scoped, tag = 'internal scratch']
  %s0 = inlined_call_operand.hbm [shape: f32[2,4,256], index: 0, kind: input, shape index: {}]
  %s1 = inlined_call_operand.hbm [shape: f32[2,4,256], index: 1, kind: input, shape index: {}]
  %s2 = inlined_call_operand.hbm [shape: f32[2,1,256], index: 2, kind: output, shape index: {}]
  %s3 = sld [smem:[#allocation0]]
  $region30: #{tpu_custom_call.1} parent=0
    _
  %s5 = ssub.s32 1, %s3
  %s6 = scalar_select 0, %s5, %s3
  $region1: #{tpu_custom_call.1} parent=0
    #allocation2 [shape = 'u8[8192]{0}', space=vmem, size = 0x2000, scoped, tag = 'input window, operand 0, single buffered']
    #allocation3 [shape = 's32[1]{0}', space=sflag, size = 0x4, scoped, tag = 'scoped memory for tpu_custom_call.1']
    #allocation4 [shape = 's32[1]{0}', space=sflag, size = 0x4, scoped, tag = 'scoped memory for tpu_custom_call.1']
    #allocation5 [shape = 'u8[8192]{0}', space=vmem, size = 0x2000, scoped, tag = 'input window, operand 1, single buffered']
    #allocation6 [shape = 's32[1]{0}', space=sflag, size = 0x4, scoped, tag = 'scoped memory for tpu_custom_call.1']
    #allocation7 [shape = 'u8[2048]{0}', space=vmem, size = 0x800, scoped, tag = 'output window, operand 0, single buffered']
    %7 = vsyncpa [#allocation3], 0
    %8 = vsyncpa [#allocation6], 0
    %9 = vsyncpa [#allocation4], 0
    // Predicated region
    $region2: #{tpu_custom_call.1} parent=1 // pred_check
      _
    $region3: #{tpu_custom_call.1} parent=1 // pred_check_branch
      %11 = sbr.rel (0) target = $region5
    $region4: #{tpu_custom_call.1} parent=1 // pred_region
      %s12 = sadd.s32 0, 0
      %s13 = smul.u32 2, %s12
      %15 = vsyncadd [#allocation3], 0
      %s16 = smul.addr %s13, 4
      %s17 = scalar_lea.hbm %s0, %s16
      %s18 = sshll.u32 %s17, 4
      %s19 = int_to_ptr.hbm [resolvable:$true] %s18
      %s20 = sshll.u32 [#allocation2], 4
      %s21 = int_to_ptr.vmem [resolvable:$true] %s20
      %26 = dma.hbm_to_vmem [thread:$0]  %s19, 256, %s21, [#allocation3], 128, 128, 8
    $region5: #{tpu_custom_call.1} parent=1 // pred_fallthru
      _
    // Predicated region
    $region6: #{tpu_custom_call.1} parent=1 // pred_check
      _
    $region7: #{tpu_custom_call.1} parent=1 // pred_check_branch
      %28 = sbr.rel (0) target = $region9
    $region8: #{tpu_custom_call.1} parent=1 // pred_region
      %s29 = sadd.s32 0, 0
      %s30 = smul.u32 2, %s29
      %32 = vsyncadd [#allocation6], 0
      %s33 = smul.addr %s30, 4
      %s34 = scalar_lea.hbm %s1, %s33
      %s35 = sshll.u32 %s34, 4
      %s36 = int_to_ptr.hbm [resolvable:$true] %s35
      %s37 = sshll.u32 [#allocation5], 4
      %s38 = int_to_ptr.vmem [resolvable:$true] %s37
      %43 = dma.hbm_to_vmem [thread:$0]  %s36, 256, %s38, [#allocation6], 128, 128, 8
    $region9: #{tpu_custom_call.1} parent=1 // pred_fallthru
      _
    // Predicated region
    $region10: #{tpu_custom_call.1} parent=1 // pred_check
      _
    $region11: #{tpu_custom_call.1} parent=1 // pred_check_branch
      %45 = sbr.rel (0) target = $region13
    $region12: #{tpu_custom_call.1} parent=1 // pred_region
      %47 = dma.done [#allocation3], 256
    $region13: #{tpu_custom_call.1} parent=1 // pred_fallthru
      _
    // Predicated region
    $region14: #{tpu_custom_call.1} parent=1 // pred_check
      _
    $region15: #{tpu_custom_call.1} parent=1 // pred_check_branch
      %49 = sbr.rel (0) target = $region17
    $region16: #{tpu_custom_call.1} parent=1 // pred_region
      %51 = dma.done [#allocation6], 256
    $region17: #{tpu_custom_call.1} parent=1 // pred_fallthru
      _
    %s52 = sadd.s32 0, 0
    %s53 = smul.u32 2, %s52
    %s54 = sadd.s32 0, 0
    %s55 = smul.u32 2, %s54
    %s56 = sadd.s32 0, 0
    %s57 = smul.u32 2, %s56
    %p58 = scmp.eq.s32.totalorder 0, 0
    // Predicated region
    $region18: #{tpu_custom_call.1} parent=1 // pred_check
      %p59 = pneg %p58
    $region19: #{tpu_custom_call.1} parent=1 // pred_check_branch
      %61 = sbr.rel (%p59) target = $region21
    $region20: #{tpu_custom_call.1} parent=1 // pred_region
      %v62 = vlaneseq
      %vm63 = vcmp.ge.s32.totalorder %v62, 0
      %vm64 = vcmp.lt.s32.totalorder %v62, 256
      %vm65 = vmand %vm63, %vm64
      %66 = vst.msk [vmem:[#allocation7] sm:$0x3] %vm65, 0.0
      %67 = vst.msk [vmem:[#allocation7 + $0x2] sm:$0x3] %vm65, 0.0
    $region21: #{tpu_custom_call.1} parent=1 // pred_fallthru
      _
    %v68 = vld [vmem:[#allocation2] sm:$0xff]
    %v69 = vld [vmem:[#allocation2 + $0x8] sm:$0xff]
    %v70 = vld [vmem:[#allocation5] sm:$0xff]
    %v71 = vld [vmem:[#allocation5 + $0x8] sm:$0xff]
    %v72 = vld [vmem:[#allocation7] sm:$0x3]
    %v73 = vld [vmem:[#allocation7 + $0x2] sm:$0x3]
    %76 = vst [vmem:[#allocation1] ss:$2 sm:$0xff] %v68
    %v77 = vld.sshfl [vmem:[#allocation1] sm:$0xff pattern:$0x75316420]
    %v78 = vld.sshfl [vmem:[#allocation1 + $0x8] sm:$0xff pattern:$0x75316420]
    %s79 = scalar_lea.vmem [#allocation1], 16
    %80 = vst [vmem:[%s79] ss:$2 sm:$0xff] %v69
    %v81 = vld.sshfl [vmem:[#allocation1 + $0x10] sm:$0xff pattern:$0x75316420]
    %v82 = vld.sshfl [vmem:[#allocation1 + $0x18] sm:$0xff pattern:$0x75316420]
    %vm87 = vcmask 1043456
    %v88 = vsel %vm87, %v77, -inf
    %v89 = vrot.slane %v88, 4
    %v90 = vmax.f32 %v88, %v89
    %v91 = vrot.slane %v90, 2
    %v92 = vmax.f32 %v90, %v91
    %v93 = vrot.slane %v92, 1
    %v94 = vmax.f32 %v92, %v93
    %v95 = vsel %vm87, %v78, -inf
    %v96 = vrot.slane %v95, 4
    %v97 = vmax.f32 %v95, %v96
    %v98 = vrot.slane %v97, 2
    %v99 = vmax.f32 %v97, %v98
    %v100 = vrot.slane %v99, 1
    %v101 = vmax.f32 %v99, %v100
    %v102 = vsel %vm87, %v81, -inf
    %v103 = vrot.slane %v102, 4
    %v104 = vmax.f32 %v102, %v103
    %v105 = vrot.slane %v104, 2
    %v106 = vmax.f32 %v104, %v105
    %v107 = vrot.slane %v106, 1
    %v108 = vmax.f32 %v106, %v107
    %v109 = vsel %vm87, %v82, -inf
    %v110 = vrot.slane %v109, 4
    %v111 = vmax.f32 %v109, %v110
    %v112 = vrot.slane %v111, 2
    %v113 = vmax.f32 %v111, %v112
    %v114 = vrot.slane %v113, 1
    %v115 = vmax.f32 %v113, %v114
    %v120 = vrot.slane %v101, 4
    %v121 = vrot.slane %v115, 4
    %v122 = vsel %vm87, %v94, %v120
    %v123 = vsel %vm87, %v108, %v121
    %v126 = vsub.f32 %v68, %v122
    %v127 = vsub.f32 %v69, %v123
    %v128 = vmul.f32 %v126, 1.442695
    %v129 = vpow.pop %v128
    %v130 = vmul.f32 %v127, 1.442695
    %v131 = vpow.pop %v130
    %134 = vst [vmem:[#allocation1] ss:$2 sm:$0xff] %v129
    %v135 = vld.sshfl [vmem:[#allocation1] sm:$0xff pattern:$0x75316420]
    %v136 = vld.sshfl [vmem:[#allocation1 + $0x8] sm:$0xff pattern:$0x75316420]
    %s137 = scalar_lea.vmem [#allocation1], 16
    %138 = vst [vmem:[%s137] ss:$2 sm:$0xff] %v131
    %v139 = vld.sshfl [vmem:[#allocation1 + $0x10] sm:$0xff pattern:$0x75316420]
    %v140 = vld.sshfl [vmem:[#allocation1 + $0x18] sm:$0xff pattern:$0x75316420]
    %v145 = vsel %vm87, %v135, 0.0
    %v146 = vrot.slane %v145, 4
    %v147 = vadd.f32 %v145, %v146
    %v148 = vrot.slane %v147, 2
    %v149 = vadd.f32 %v147, %v148
    %v150 = vrot.slane %v149, 1
    %v151 = vadd.f32 %v149, %v150
    %v152 = vsel %vm87, %v136, 0.0
    %v153 = vrot.slane %v152, 4
    %v154 = vadd.f32 %v152, %v153
    %v155 = vrot.slane %v154, 2
    %v156 = vadd.f32 %v154, %v155
    %v157 = vrot.slane %v156, 1
    %v158 = vadd.f32 %v156, %v157
    %v159 = vsel %vm87, %v139, 0.0
    %v160 = vrot.slane %v159, 4
    %v161 = vadd.f32 %v159, %v160
    %v162 = vrot.slane %v161, 2
    %v163 = vadd.f32 %v161, %v162
    %v164 = vrot.slane %v163, 1
    %v165 = vadd.f32 %v163, %v164
    %v166 = vsel %vm87, %v140, 0.0
    %v167 = vrot.slane %v166, 4
    %v168 = vadd.f32 %v166, %v167
    %v169 = vrot.slane %v168, 2
    %v170 = vadd.f32 %v168, %v169
    %v171 = vrot.slane %v170, 1
    %v172 = vadd.f32 %v170, %v171
    %v173 = vrcp.pop %v151
    %v174 = vmul.f32 %v151, %v173
    %v175 = vsub.f32 1.0, %v174
    %v176 = vmul.f32 %v173, %v175
    %v177 = vadd.f32 %v173, %v176
    %vm178 = vweird.f32 %v151
    %vm179 = vweird.f32 %v173
    %vm180 = vmor %vm178, %vm179
    %v181 = vsel %vm180, %v173, %v177
    %v182 = vand.u32 2147483647, %v151
    %vm183 = vcmp.eq.f32.partialorder %v182, 8.507059e+37
    %v184 = vand.u32 %v151, 2147483648
    %v185 = vor.u32 1.1754944e-38, %v184
    %v186 = vsel %vm183, %v185, %v181
    %v187 = vmul.f32 1.0, %v186
    %v188 = vrcp.pop %v158
    %v189 = vmul.f32 %v158, %v188
    %v190 = vsub.f32 1.0, %v189
    %v191 = vmul.f32 %v188, %v190
    %v192 = vadd.f32 %v188, %v191
    %vm193 = vweird.f32 %v158
    %vm194 = vweird.f32 %v188
    %vm195 = vmor %vm193, %vm194
    %v196 = vsel %vm195, %v188, %v192
    %v197 = vand.u32 2147483647, %v158
    %vm198 = vcmp.eq.f32.partialorder %v197, 8.507059e+37
    %v199 = vand.u32 %v158, 2147483648
    %v200 = vor.u32 1.1754944e-38, %v199
    %v201 = vsel %vm198, %v200, %v196
    %v202 = vmul.f32 1.0, %v201
    %v203 = vrcp.pop %v165
    %v204 = vmul.f32 %v165, %v203
    %v205 = vsub.f32 1.0, %v204
    %v206 = vmul.f32 %v203, %v205
    %v207 = vadd.f32 %v203, %v206
    %vm208 = vweird.f32 %v165
    %vm209 = vweird.f32 %v203
    %vm210 = vmor %vm208, %vm209
    %v211 = vsel %vm210, %v203, %v207
    %v212 = vand.u32 2147483647, %v165
    %vm213 = vcmp.eq.f32.partialorder %v212, 8.507059e+37
    %v214 = vand.u32 %v165, 2147483648
    %v215 = vor.u32 1.1754944e-38, %v214
    %v216 = vsel %vm213, %v215, %v211
    %v217 = vmul.f32 1.0, %v216
    %v218 = vrcp.pop %v172
    %v219 = vmul.f32 %v172, %v218
    %v220 = vsub.f32 1.0, %v219
    %v221 = vmul.f32 %v218, %v220
    %v222 = vadd.f32 %v218, %v221
    %vm223 = vweird.f32 %v172
    %vm224 = vweird.f32 %v218
    %vm225 = vmor %vm223, %vm224
    %v226 = vsel %vm225, %v218, %v222
    %v227 = vand.u32 2147483647, %v172
    %vm228 = vcmp.eq.f32.partialorder %v227, 8.507059e+37
    %v229 = vand.u32 %v172, 2147483648
    %v230 = vor.u32 1.1754944e-38, %v229
    %v231 = vsel %vm228, %v230, %v226
    %v232 = vmul.f32 1.0, %v231
    %v237 = vrot.slane %v202, 4
    %v238 = vrot.slane %v232, 4
    %v239 = vsel %vm87, %v187, %v237
    %v240 = vsel %vm87, %v217, %v238
    %v243 = vmul.f32 %v129, %v239
    %v244 = vmul.f32 %v131, %v240
    %v245 = vadd.f32 %v243, 1e-09
    %v246 = vadd.f32 %v244, 1e-09
    %v247 = vlog2.pop %v245
    %v248 = vmul.f32 %v247, 0.6931472
    %v249 = vlog2.pop %v246
    %v250 = vmul.f32 %v249, 0.6931472
    %v251 = vsub.f32 0.0, %v248
    %v252 = vsub.f32 0.0, %v250
    %v253 = vsub.f32 1.0, %v245
    %v254 = vsub.f32 1.0, %v246
    %v255 = vmul.f32 %v253, %v253
    %v256 = vmul.f32 %v254, %v254
    %v257 = vmul.f32 %v70, %v251
    %v258 = vmul.f32 %v71, %v252
    %v259 = vmul.f32 %v257, %v255
    %v260 = vmul.f32 %v258, %v256
    %263 = vst [vmem:[#allocation1] ss:$2 sm:$0xff] %v259
    %v264 = vld.sshfl [vmem:[#allocation1] sm:$0xff pattern:$0x75316420]
    %v265 = vld.sshfl [vmem:[#allocation1 + $0x8] sm:$0xff pattern:$0x75316420]
    %s266 = scalar_lea.vmem [#allocation1], 16
    %267 = vst [vmem:[%s266] ss:$2 sm:$0xff] %v260
    %v268 = vld.sshfl [vmem:[#allocation1 + $0x10] sm:$0xff pattern:$0x75316420]
    %v269 = vld.sshfl [vmem:[#allocation1 + $0x18] sm:$0xff pattern:$0x75316420]
    %v274 = vsel %vm87, %v264, 0.0
    %v275 = vrot.slane %v274, 4
    %v276 = vadd.f32 %v274, %v275
    %v277 = vrot.slane %v276, 2
    %v278 = vadd.f32 %v276, %v277
    %v279 = vrot.slane %v278, 1
    %v280 = vadd.f32 %v278, %v279
    %v281 = vsel %vm87, %v265, 0.0
    %v282 = vrot.slane %v281, 4
    %v283 = vadd.f32 %v281, %v282
    %v284 = vrot.slane %v283, 2
    %v285 = vadd.f32 %v283, %v284
    %v286 = vrot.slane %v285, 1
    %v287 = vadd.f32 %v285, %v286
    %v288 = vsel %vm87, %v268, 0.0
    %v289 = vrot.slane %v288, 4
    %v290 = vadd.f32 %v288, %v289
    %v291 = vrot.slane %v290, 2
    %v292 = vadd.f32 %v290, %v291
    %v293 = vrot.slane %v292, 1
    %v294 = vadd.f32 %v292, %v293
    %v295 = vsel %vm87, %v269, 0.0
    %v296 = vrot.slane %v295, 4
    %v297 = vadd.f32 %v295, %v296
    %v298 = vrot.slane %v297, 2
    %v299 = vadd.f32 %v297, %v298
    %v300 = vrot.slane %v299, 1
    %v301 = vadd.f32 %v299, %v300
    %v302 = vmul.f32 %v280, 0.25
    %v303 = vmul.f32 %v287, 0.25
    %v304 = vmul.f32 %v294, 0.25
    %v305 = vmul.f32 %v301, 0.25
    %v310 = vrot.slane %v303, 7
    %v311 = vrot.slane %v305, 7
    %vm312 = vcmask 1040384
    %v313 = vsel %vm312, %v302, %v310
    %v314 = vsel %vm312, %v304, %v311
    %v317 = vadd.f32 %v72, %v313
    %v318 = vadd.f32 %v73, %v314
    %v319 = vlaneseq
    %vm320 = vcmp.ge.s32.totalorder %v319, 0
    %vm321 = vcmp.lt.s32.totalorder %v319, 256
    %vm322 = vmand %vm320, %vm321
    %323 = vst.msk [vmem:[#allocation7] sm:$0x3] %vm322, %v317
    %324 = vst.msk [vmem:[#allocation7 + $0x2] sm:$0x3] %vm322, %v318
    // Predicated region
    $region22: #{tpu_custom_call.1} parent=1 // pred_check
      _
    $region23: #{tpu_custom_call.1} parent=1 // pred_check_branch
      %326 = sbr.rel (0) target = $region25
    $region24: #{tpu_custom_call.1} parent=1 // pred_region
      %s327 = sadd.s32 0, 0
      %s328 = smul.u32 2, %s327
      %330 = vsyncadd [#allocation4], 0
      %s331 = smul.addr %s328, 2
      %s332 = scalar_lea.hbm %s2, %s331
      %s333 = sshll.u32 [#allocation7], 4
      %s334 = int_to_ptr.vmem [resolvable:$true] %s333
      %s335 = sshll.u32 %s332, 4
      %s336 = int_to_ptr.hbm [resolvable:$true] %s335
      %341 = dma.vmem_to_hbm [thread:$0]  %s334, 64, %s336, [#allocation4], 32, 32, 2
    $region25: #{tpu_custom_call.1} parent=1 // pred_fallthru
      _
    // Predicated region
    $region26: #{tpu_custom_call.1} parent=1 // pred_check
      _
    $region27: #{tpu_custom_call.1} parent=1 // pred_check_branch
      %343 = sbr.rel (0) target = $region29
    $region28: #{tpu_custom_call.1} parent=1 // pred_region
      %345 = dma.done [#allocation4], 64
    $region29: #{tpu_custom_call.1} parent=1 // pred_fallthru
      _
    %346 = vsyncpa [#allocation3], 1
    %347 = vsyncpa [#allocation6], 1
    %348 = vsyncpa [#allocation4], 1

</llo_original>
